<compile_context>
chip_gen: v7x
topology: tpu7x:2x2x1
jax: 0.10.0
libtpu: 0.0.40
codegen_flags: <defaults>
</compile_context>

<pallas_src>
import math
from functools import partial

import jax
import jax.numpy as jnp
from jax import lax
from jax.experimental import pallas as pl
from jax.experimental.pallas import tpu as pltpu


def _agcn_kernel(adj_ref, xn_ref, norm_ref, logit_pre_ref, init_ref, w2_ref,
                 out_ref, *, xn_resident):
    k = pl.program_id(1)

    @pl.when(k == 0)
    def _():
        out_ref[...] = jnp.zeros_like(out_ref)

    # Adjacency arrives as int8 (0/1 exact); cheap VPU cast to bf16 for the MXU.
    adj = adj_ref[...].astype(jnp.bfloat16)
    if xn_resident:
        xn = xn_ref[k]          # (tk, Dp) slice of the VMEM-resident feature slab
    else:
        xn = xn_ref[...]        # streamed (tk, Dp) block

    # f32 accumulation directly into the resident output tile (its block index
    # is constant along k, so it persists across the whole K reduction).
    out_ref[...] += jnp.dot(adj, xn, preferred_element_type=jnp.float32)

    @pl.when(k == pl.num_programs(1) - 1)
    def _():
        norm = norm_ref[...]                                   # (tm, 1) f32
        h = out_ref[...] * norm                                # post-agg scaling
        # alpha logit: h_pre half precomputed in wrapper; h half = VPU mul +
        # XLU lane reduce; sigmoid on EUP.
        logit = logit_pre_ref[...] + jnp.sum(h * w2_ref[...], axis=-1,
                                             keepdims=True)   # (tm, 1)
        alpha = jax.nn.sigmoid(logit)
        out_ref[...] = alpha * h + init_ref[...]
        # TODO(synk): activation / residual / dropout branches disabled (module
        # defaults activation=None, residual=False, dropout=0); add here if enabled.


def _vmem_capacity_bytes():
    try:
        return int(pltpu.get_tpu_info().vmem_capacity_bytes)
    except Exception:
        return 64 << 20    # conservative fallback: v7x has 64 MiB per TensorCore


def _pad2(a, rows, cols):
    pr, pc = rows - a.shape[0], cols - a.shape[1]
    if pr == 0 and pc == 0:
        return a
    return jnp.pad(a, ((0, pr), (0, pc)))


def agcn_layer(adj, features, initial_features, a_weight, *, tm=512, tk=1024):
    """adj: (N, N) 0/1, features/initial_features: (N, D), a_weight: (1, 2D)."""
    N, D = features.shape
    Dp = pl.cdiv(D, 128) * 128
    N128 = pl.cdiv(N, 128) * 128

    # Tile selection: don't exceed the (padded) problem, and keep >= 2 row
    # blocks when the graph allows it so both v7x TensorCores get work on the
    # "parallel" row axis.
    tm = max(128, min(tm, 128 * max(1, pl.cdiv(N, 2 * 128))))
    tk = max(128, min(tk, N128))
    Nm = pl.cdiv(N, tm) * tm          # padded row (output) axis
    Nk = pl.cdiv(N, tk) * tk          # padded reduction axis

    # Per-generation VMEM plan (v7x: 64 MiB/TC; v5e/v6e: 128 MiB).  Prefer a
    # whole-array-resident xn (removes the per-row-block refetch of the
    # (Nk, Dp) slab); fall back to streaming its (tk, Dp) block otherwise.
    cap = _vmem_capacity_bytes()
    vmem_limit = min(int(cap * 0.85), 110 << 20)

    def vmem_estimate(resident):
        adj_b = 2 * tm * tk                              # int8, double-buffered
        xn_b = 2 * (Nk if resident else tk) * Dp * 2     # bf16
        io_b = 2 * 2 * tm * Dp * 4                       # init in + out tile, f32
        small = 4 * tm * 128 * 4 + 2 * Dp * 4 + (2 << 20)  # norm/logit_pre/w2 + headroom
        return adj_b + xn_b + io_b + small

    xn_resident = vmem_estimate(True) <= int(vmem_limit * 0.85)

    features = features.astype(jnp.float32)
    initial_features = initial_features.astype(jnp.float32)
    a_weight = a_weight.astype(jnp.float32)

    # Graph norm + the h_pre half of the alpha logit hoisted into the wrapper
    # (one cheap XLA pass each) so the K-tiled kernel loop is pure MXU work.
    # Degrees are summed straight from the caller's adjacency (no f32 upcast pass).
    degs = jnp.maximum(jnp.sum(adj, axis=1, keepdims=True, dtype=jnp.float32), 1.0)
    norm = lax.rsqrt(degs)                                        # (N, 1)
    logit_pre = features @ a_weight[:, :D].T                      # (N, 1)

    # Adjacency travels HBM->VMEM as int8 (0/1 is exact); zero padding is
    # semantics-preserving (padded feature columns stay zero through the
    # aggregation and the alpha logit, padded rows are sliced off at the end).
    adj_p = _pad2(adj.astype(jnp.int8), Nm, Nk)
    xn_p = _pad2((features * norm).astype(jnp.bfloat16), Nk, Dp)
    if xn_resident:
        xn_p = xn_p.reshape(Nk // tk, tk, Dp)
        xn_spec = pl.BlockSpec((Nk // tk, tk, Dp), lambda i, k: (0, 0, 0))
    else:
        xn_spec = pl.BlockSpec((tk, Dp), lambda i, k: (k, 0))
    init_p = _pad2(initial_features, Nm, Dp)
    norm_p = _pad2(norm, Nm, 1)
    logit_pre_p = _pad2(logit_pre, Nm, 1)
    w2 = _pad2(a_weight[:, D:], 1, Dp)                            # acts on aggregated h

    grid = (Nm // tm, Nk // tk)

    out = pl.pallas_call(
        partial(_agcn_kernel, xn_resident=xn_resident),
        out_shape=jax.ShapeDtypeStruct((Nm, Dp), jnp.float32),
        grid=grid,
        in_specs=[
            pl.BlockSpec((tm, tk), lambda i, k: (i, k)),   # adjacency tile (int8)
            xn_spec,                                       # scaled features (bf16)
            pl.BlockSpec((tm, 1), lambda i, k: (i, 0)),    # norm row block
            pl.BlockSpec((tm, 1), lambda i, k: (i, 0)),    # precomputed h_pre logit
            pl.BlockSpec((tm, Dp), lambda i, k: (i, 0)),   # initial features
            pl.BlockSpec((1, Dp), lambda i, k: (0, 0)),    # a-weight half for h
        ],
        out_specs=pl.BlockSpec((tm, Dp), lambda i, k: (i, 0)),
        compiler_params=pltpu.CompilerParams(
            dimension_semantics=("parallel", "arbitrary"),
            vmem_limit_bytes=vmem_limit,
        ),
    )(adj_p, xn_p, norm_p, logit_pre_p, init_p, w2)

    return out[:N, :D]


def agcn_reference(adj, features, initial_features, a_weight):
    degs = jnp.maximum(jnp.sum(adj, axis=1, keepdims=True), 1.0)
    norm = degs ** -0.5
    h = features * norm
    h = adj @ h
    h = h * norm
    hs = jnp.concatenate([features, h], axis=1)
    alpha = jax.nn.sigmoid(hs @ a_weight.T)
    return alpha * h + initial_features


if __name__ == "__main__":
    key = jax.random.PRNGKey(0)
    k_adj, k_x, k_init, k_w = jax.random.split(key, 4)

    N = 256         # number of graph nodes (2 row blocks -> both TCs on v7x)
    D = 64          # in_dim == out_dim (padded to 128 lanes inside the wrapper)

    # deterministic synthetic graph + features
    adj = (jax.random.uniform(k_adj, (N, N)) < 0.05).astype(jnp.float32)
    features = jax.random.normal(k_x, (N, D), dtype=jnp.float32)
    initial_features = jax.random.normal(k_init, (N, D), dtype=jnp.float32)

    # xavier_uniform init for a.weight (shape (1, in_dim + out_dim)), gain=1
    fan_in, fan_out = 2 * D, 1
    bound = math.sqrt(6.0 / (fan_in + fan_out))
    a_weight = jax.random.uniform(k_w, (1, 2 * D), minval=-bound, maxval=bound,
                                  dtype=jnp.float32)
    # (self.linear is unused in forward(), so its weight is not needed.)

    out = agcn_layer(adj, features, initial_features, a_weight)
    out = jax.block_until_ready(out)

    ref = agcn_reference(adj, features, initial_features, a_weight)
    assert out.shape == (N, D)
    max_err = float(jnp.max(jnp.abs(out - ref)))
    assert jnp.allclose(out, ref, atol=1e-2, rtol=1e-2), (
        f"mismatch vs JAX reference (max abs err {max_err})")

    print("KERNEL_OK")
</pallas_src>

<mosaic_0001>
module attributes {stable_mosaic.version = 11 : i64} {
  func.func @_agcn_kernel(%arg0: i32, %arg1: i32, %arg2: memref<128x256xi8, #tpu.memory_space<vmem>>, %arg3: memref<1x256x128xbf16, #tpu.memory_space<vmem>>, %arg4: memref<128x1xf32, #tpu.memory_space<vmem>>, %arg5: memref<128x1xf32, #tpu.memory_space<vmem>>, %arg6: memref<128x128xf32, #tpu.memory_space<vmem>>, %arg7: memref<1x128xf32, #tpu.memory_space<vmem>>, %arg8: memref<128x128xf32, #tpu.memory_space<vmem>>) attributes {dimension_semantics = [#tpu.dimension_semantics<parallel>, #tpu.dimension_semantics<arbitrary>], iteration_bounds = array<i64: 2, 1>, scalar_prefetch = 0 : i64, scratch_operands = 0 : i64, tpu.core_type = #tpu.core_type<tc>, window_params = [{transform_indices = @transform_0, window_bounds = array<i64: 128, 256>}, {pipeline_mode = #tpu.pipeline_mode<synchronous>, transform_indices = @transform_1, window_bounds = array<i64: 1, 256, 128>}, {transform_indices = @transform_2, window_bounds = array<i64: 128, 1>}, {transform_indices = @transform_3, window_bounds = array<i64: 128, 1>}, {transform_indices = @transform_4, window_bounds = array<i64: 128, 128>}, {pipeline_mode = #tpu.pipeline_mode<synchronous>, transform_indices = @transform_5, window_bounds = array<i64: 1, 128>}, {transform_indices = @transform_6, window_bounds = array<i64: 128, 128>}]} {
    %c0_i32 = arith.constant 0 : i32
    %0 = arith.cmpi eq, %arg1, %c0_i32 : i32
    %1 = arith.extui %0 : i1 to i32
    %c0_i32_0 = arith.constant 0 : i32
    %2 = arith.cmpi ne, %1, %c0_i32_0 : i32
    scf.if %2 {
      %cst_10 = arith.constant 0.000000e+00 : f32
      %15 = vector.broadcast %cst_10 : f32 to vector<128x128xf32>
      %c0_11 = arith.constant 0 : index
      %c0_12 = arith.constant 0 : index
      %16 = vector.load %arg8[%c0_11, %c0_12] : memref<128x128xf32, #tpu.memory_space<vmem>>, vector<128x128xf32>
      tpu.vector_store %arg8[%c0_11, %c0_12], %15 {strides = array<i32>} : memref<128x128xf32, #tpu.memory_space<vmem>>, vector<128x128xf32>,
    } else {
    }
    %c0 = arith.constant 0 : index
    %c0_1 = arith.constant 0 : index
    %3 = vector.load %arg2[%c0, %c0_1] : memref<128x256xi8, #tpu.memory_space<vmem>>, vector<128x256xi8>
    %4 = arith.sitofp %3 : vector<128x256xi8> to vector<128x256xbf16>
    %5 = arith.index_cast %arg1 : i32 to index
    %c0_2 = arith.constant 0 : index
    %c0_3 = arith.constant 0 : index
    %6 = vector.load %arg3[%5, %c0_2, %c0_3] : memref<1x256x128xbf16, #tpu.memory_space<vmem>>, vector<1x256x128xbf16>
    %7 = vector.shape_cast %6 : vector<1x256x128xbf16> to vector<256x128xbf16>
    %c0_4 = arith.constant 0 : index
    %c0_5 = arith.constant 0 : index
    %8 = vector.load %arg8[%c0_4, %c0_5] : memref<128x128xf32, #tpu.memory_space<vmem>>, vector<128x128xf32>
    %cst = arith.constant dense<0.000000e+00> : vector<128x128xf32>
    %9 = tpu.matmul %4, %7, %cst {dimension_numbers = #tpu.dot_dimension_numbers<[1], [0], [0], [1], [0, 0, 1, 1], [], []>} : vector<128x256xbf16>, vector<256x128xbf16>, vector<128x128xf32> -> vector<128x128xf32>
    %10 = arith.addf %8, %9 : vector<128x128xf32>
    %c0_6 = arith.constant 0 : index
    %c0_7 = arith.constant 0 : index
    %11 = vector.load %arg8[%c0_6, %c0_7] : memref<128x128xf32, #tpu.memory_space<vmem>>, vector<128x128xf32>
    tpu.vector_store %arg8[%c0_6, %c0_7], %10 {strides = array<i32>} : memref<128x128xf32, #tpu.memory_space<vmem>>, vector<128x128xf32>,
    %c0_i32_8 = arith.constant 0 : i32
    %12 = arith.cmpi eq, %arg1, %c0_i32_8 : i32
    %13 = arith.extui %12 : i1 to i32
    %c0_i32_9 = arith.constant 0 : i32
    %14 = arith.cmpi ne, %13, %c0_i32_9 : i32
    scf.if %14 {
      %c0_10 = arith.constant 0 : index
      %c0_11 = arith.constant 0 : index
      %15 = vector.load %arg4[%c0_10, %c0_11] : memref<128x1xf32, #tpu.memory_space<vmem>>, vector<128x1xf32>
      %c0_12 = arith.constant 0 : index
      %c0_13 = arith.constant 0 : index
      %16 = vector.load %arg8[%c0_12, %c0_13] : memref<128x128xf32, #tpu.memory_space<vmem>>, vector<128x128xf32>
      %17 = vector.broadcast %15 : vector<128x1xf32> to vector<128x128xf32>
      %18 = arith.mulf %16, %17 : vector<128x128xf32>
      %c0_14 = arith.constant 0 : index
      %c0_15 = arith.constant 0 : index
      %19 = vector.load %arg5[%c0_14, %c0_15] : memref<128x1xf32, #tpu.memory_space<vmem>>, vector<128x1xf32>
      %c0_16 = arith.constant 0 : index
      %c0_17 = arith.constant 0 : index
      %20 = vector.load %arg7[%c0_16, %c0_17] : memref<1x128xf32, #tpu.memory_space<vmem>>, vector<1x128xf32>
      %21 = vector.broadcast %20 : vector<1x128xf32> to vector<128x128xf32>
      %22 = arith.mulf %18, %21 : vector<128x128xf32>
      %cst_18 = arith.constant dense<0.000000e+00> : vector<128xf32>
      %23 = vector.multi_reduction <add>, %22, %cst_18 [1] : vector<128x128xf32> to vector<128xf32>
      %24 = vector.shape_cast %23 : vector<128xf32> to vector<128x1xf32>
      %25 = arith.addf %19, %24 : vector<128x1xf32>
      %26 = arith.negf %25 : vector<128x1xf32>
      %27 = math.exp %26 : vector<128x1xf32>
      %cst_19 = arith.constant 1.000000e+00 : f32
      %28 = vector.broadcast %cst_19 : f32 to vector<128x1xf32>
      %29 = arith.addf %28, %27 : vector<128x1xf32>
      %30 = arith.divf %28, %29 : vector<128x1xf32>
      %31 = vector.broadcast %30 : vector<128x1xf32> to vector<128x128xf32>
      %32 = arith.mulf %31, %18 : vector<128x128xf32>
      %c0_20 = arith.constant 0 : index
      %c0_21 = arith.constant 0 : index
      %33 = vector.load %arg6[%c0_20, %c0_21] : memref<128x128xf32, #tpu.memory_space<vmem>>, vector<128x128xf32>
      %34 = arith.addf %32, %33 : vector<128x128xf32>
      %c0_22 = arith.constant 0 : index
      %c0_23 = arith.constant 0 : index
      %35 = vector.load %arg8[%c0_22, %c0_23] : memref<128x128xf32, #tpu.memory_space<vmem>>, vector<128x128xf32>
      tpu.vector_store %arg8[%c0_22, %c0_23], %34 {strides = array<i32>} : memref<128x128xf32, #tpu.memory_space<vmem>>, vector<128x128xf32>,
    } else {
    }
    return
  }
  func.func @transform_0(%arg0: i32, %arg1: i32) -> (i32, i32) {
    %c0_i32 = arith.constant 0 : i32
    return %arg0, %arg1 : i32, i32
  }
  func.func @transform_1(%arg0: i32, %arg1: i32) -> (i32, i32, i32) {
    %c0_i32 = arith.constant 0 : i32
    %c0_i32_0 = arith.constant 0 : i32
    %c0_i32_1 = arith.constant 0 : i32
    %c0_i32_2 = arith.constant 0 : i32
    return %c0_i32, %c0_i32_0, %c0_i32_1 : i32, i32, i32
  }
  func.func @transform_2(%arg0: i32, %arg1: i32) -> (i32, i32) {
    %c0_i32 = arith.constant 0 : i32
    %c0_i32_0 = arith.constant 0 : i32
    return %arg0, %c0_i32 : i32, i32
  }
  func.func @transform_3(%arg0: i32, %arg1: i32) -> (i32, i32) {
    %c0_i32 = arith.constant 0 : i32
    %c0_i32_0 = arith.constant 0 : i32
    return %arg0, %c0_i32 : i32, i32
  }
  func.func @transform_4(%arg0: i32, %arg1: i32) -> (i32, i32) {
    %c0_i32 = arith.constant 0 : i32
    %c0_i32_0 = arith.constant 0 : i32
    return %arg0, %c0_i32 : i32, i32
  }
  func.func @transform_5(%arg0: i32, %arg1: i32) -> (i32, i32) {
    %c0_i32 = arith.constant 0 : i32
    %c0_i32_0 = arith.constant 0 : i32
    %c0_i32_1 = arith.constant 0 : i32
    return %c0_i32, %c0_i32_0 : i32, i32
  }
  func.func @transform_6(%arg0: i32, %arg1: i32) -> (i32, i32) {
    %c0_i32 = arith.constant 0 : i32
    %c0_i32_0 = arith.constant 0 : i32
    return %arg0, %c0_i32 : i32, i32
  }
}

</mosaic_0001>

<llo_original>
// kernel: tpu_custom_call.1
$region0: #{tpu_custom_call.1}
  #allocation0 [shape = 'u32[]', space=smem, size = 0x4, offset = 0x4, fixed_abs, tag = 'smem constant byte address 0x4 - core index']
  #allocation1 [shape = 'u32[144,128]{1,0:T(1,128)}', space=vmem, size = 0x12000, scoped, tag = 'internal scratch']
  %s0 = inlined_call_operand.vmem [shape: s8[256,256], index: 0, kind: input, shape index: {}]
  %s1 = inlined_call_operand.vmem [shape: bf16[1,256,128], index: 1, kind: input, shape index: {}]
  %s2 = inlined_call_operand.vmem [shape: f32[256,1], index: 2, kind: input, shape index: {}]
  %s3 = inlined_call_operand.vmem [shape: f32[256,1], index: 3, kind: input, shape index: {}]
  %s4 = inlined_call_operand.vmem [shape: f32[256,128], index: 4, kind: input, shape index: {}]
  %s5 = inlined_call_operand.vmem [shape: f32[1,128], index: 5, kind: input, shape index: {}]
  %s6 = inlined_call_operand.hbm [shape: f32[256,128], index: 6, kind: output, shape index: {}]
  %s7 = sld [smem:[#allocation0]]
  $region65: #{tpu_custom_call.1} parent=0
    _
  %s9 = ssub.s32 1, %s7
  %s10 = scalar_select 0, %s9, %s7
  $region1: #{tpu_custom_call.1} parent=0
    #allocation2 [shape = 'u8[131072]{0}', space=vmem, size = 0x20000, scoped, tag = 'output window, operand 0']
    #allocation3 [shape = 's32[2]{0}', space=sflag, size = 0x8, scoped, tag = 'scoped memory for tpu_custom_call.1']
    %11 = vsyncpa [#allocation3], 0
    %s12 = scalar_lea.sflag [#allocation3], 1
    %13 = vsyncpa %s12, 0
    loop: start=0, step=1, limit=4
    $region2: #{tpu_custom_call.1} parent=1 // loop_pre_header
      _
    $region3: #{tpu_custom_call.1} parent=1 // loop_header
      %s15 = sphi 0, %s19
      %p16 = scmp.ge.s32.totalorder %s15, 4
      %s22 = sphi 0, %s34
      %s23 = sphi 0, %s30
      %s24 = sphi 0, %s22
      %s25 = sphi 0, %s23
      %s26 = sphi 0, %s24
      %s27 = sphi 0, %s25
      %s39 = sphi 0, %s41
      %s42 = sphi 0, %s39
      %s43 = sphi 0, %s42
      %s59 = sphi 0, %s43
      %s63 = sphi 0, %s63
      %s65 = sphi 0, %s63
      %s66 = sphi 0, %s65
      %s80 = sphi 0, %s66
      %s86 = sphi 0, %s88
      %s89 = sphi 0, %s86
      %s90 = sphi 0, %s89
      %s106 = sphi 0, %s90
      %s112 = sphi 0, %s114
      %s115 = sphi 0, %s112
      %s116 = sphi 0, %s115
      %s132 = sphi 0, %s116
      %s138 = sphi 0, %s140
      %s141 = sphi 0, %s138
      %s142 = sphi 0, %s141
      %s158 = sphi 0, %s142
      %s162 = sphi 0, %s162
      %s164 = sphi 0, %s162
      %s165 = sphi 0, %s164
      %s179 = sphi 0, %s165
      %s185 = sphi 0, %s187
      %s188 = sphi 0, %s185
      %s189 = sphi 0, %s188
      %s205 = sphi 0, %s189
    $region4: #{tpu_custom_call.1} parent=1 // loop_header_branch
      %18 = sbr.rel (%p16) target = $region8
    $region5: #{tpu_custom_call.1} parent=1 // loop_body
      %s20 = ssub.s32 %s15, 1
      %s21 = ssub.s32 %s15, 2
      %s28 = sadd.s32 1, %s23
      %p29 = scmp.ge.s32.totalorder %s28, 1
      %s30 = scalar_select %p29, 0, %s28
      %s31 = sadd.s32 1, %s22
      %s32 = scalar_select %p29, %s31, %s22
      %p33 = scmp.ge.s32.totalorder %s32, 2
      %s34 = scalar_select %p33, 0, %s32
      %s35 = ssub.s32 %s22, %s34
      %s36 = ssub.s32 %s23, %s30
      %s37 = sor.u32 %s35, %s36
      %p38 = scmp.eq.s32.totalorder %s37, 0
      %s40 = sadd.s32 %s39, 1
      %s41 = scalar_select %p38, %s39, %s40
      %p44 = pneg %p38
      %p45 = scmp.eq.s32.totalorder %s15, 1
      %p46 = por %p44, %p45
      %p47 = scmp.ne.s32.totalorder %s39, %s42
      %p48 = scmp.eq.s32.totalorder %s15, 0
      %p49 = por %p47, %p48
      %p50 = scmp.ne.s32.totalorder %s39, %s42
      %p51 = scmp.eq.s32.totalorder %s20, 1
      %p52 = por %p50, %p51
      %p53 = scmp.ne.s32.totalorder %s42, %s43
      %p54 = scmp.eq.s32.totalorder %s20, 0
      %p55 = por %p53, %p54
      %p56 = scmp.ne.s32.totalorder %s42, %s43
      %p57 = scmp.eq.s32.totalorder %s21, 1
      %p58 = por %p56, %p57
      %p60 = scmp.ne.s32.totalorder %s43, %s59
      %p61 = scmp.eq.s32.totalorder %s21, 0
      %p62 = por %p60, %p61
      %s64 = sadd.s32 %s63, 1
      %p67 = scmp.eq.s32.totalorder %s15, 1
      %p68 = scmp.ne.s32.totalorder %s63, %s65
      %p69 = scmp.eq.s32.totalorder %s15, 0
      %p70 = por %p68, %p69
      %p71 = scmp.ne.s32.totalorder %s63, %s65
      %p72 = scmp.eq.s32.totalorder %s20, 1
      %p73 = por %p71, %p72
      %p74 = scmp.ne.s32.totalorder %s65, %s66
      %p75 = scmp.eq.s32.totalorder %s20, 0
      %p76 = por %p74, %p75
      %p77 = scmp.ne.s32.totalorder %s65, %s66
      %p78 = scmp.eq.s32.totalorder %s21, 1
      %p79 = por %p77, %p78
      %p81 = scmp.ne.s32.totalorder %s66, %s80
      %p82 = scmp.eq.s32.totalorder %s21, 0
      %p83 = por %p81, %p82
      %s84 = ssub.s32 %s22, %s34
      %p85 = scmp.eq.s32.totalorder %s84, 0
      %s87 = sadd.s32 %s86, 1
      %s88 = scalar_select %p85, %s86, %s87
      %p91 = pneg %p85
      %p92 = scmp.eq.s32.totalorder %s15, 1
      %p93 = por %p91, %p92
      %p94 = scmp.ne.s32.totalorder %s86, %s89
      %p95 = scmp.eq.s32.totalorder %s15, 0
      %p96 = por %p94, %p95
      %p97 = scmp.ne.s32.totalorder %s86, %s89
      %p98 = scmp.eq.s32.totalorder %s20, 1
      %p99 = por %p97, %p98
      %p100 = scmp.ne.s32.totalorder %s89, %s90
      %p101 = scmp.eq.s32.totalorder %s20, 0
      %p102 = por %p100, %p101
      %p103 = scmp.ne.s32.totalorder %s89, %s90
      %p104 = scmp.eq.s32.totalorder %s21, 1
      %p105 = por %p103, %p104
      %p107 = scmp.ne.s32.totalorder %s90, %s106
      %p108 = scmp.eq.s32.totalorder %s21, 0
      %p109 = por %p107, %p108
      %s110 = ssub.s32 %s22, %s34
      %p111 = scmp.eq.s32.totalorder %s110, 0
      %s113 = sadd.s32 %s112, 1
      %s114 = scalar_select %p111, %s112, %s113
      %p117 = pneg %p111
      %p118 = scmp.eq.s32.totalorder %s15, 1
      %p119 = por %p117, %p118
      %p120 = scmp.ne.s32.totalorder %s112, %s115
      %p121 = scmp.eq.s32.totalorder %s15, 0
      %p122 = por %p120, %p121
      %p123 = scmp.ne.s32.totalorder %s112, %s115
      %p124 = scmp.eq.s32.totalorder %s20, 1
      %p125 = por %p123, %p124
      %p126 = scmp.ne.s32.totalorder %s115, %s116
      %p127 = scmp.eq.s32.totalorder %s20, 0
      %p128 = por %p126, %p127
      %p129 = scmp.ne.s32.totalorder %s115, %s116
      %p130 = scmp.eq.s32.totalorder %s21, 1
      %p131 = por %p129, %p130
      %p133 = scmp.ne.s32.totalorder %s116, %s132
      %p134 = scmp.eq.s32.totalorder %s21, 0
      %p135 = por %p133, %p134
      %s136 = ssub.s32 %s22, %s34
      %p137 = scmp.eq.s32.totalorder %s136, 0
      %s139 = sadd.s32 %s138, 1
      %s140 = scalar_select %p137, %s138, %s139
      %p143 = pneg %p137
      %p144 = scmp.eq.s32.totalorder %s15, 1
      %p145 = por %p143, %p144
      %p146 = scmp.ne.s32.totalorder %s138, %s141
      %p147 = scmp.eq.s32.totalorder %s15, 0
      %p148 = por %p146, %p147
      %p149 = scmp.ne.s32.totalorder %s138, %s141
      %p150 = scmp.eq.s32.totalorder %s20, 1
      %p151 = por %p149, %p150
      %p152 = scmp.ne.s32.totalorder %s141, %s142
      %p153 = scmp.eq.s32.totalorder %s20, 0
      %p154 = por %p152, %p153
      %p155 = scmp.ne.s32.totalorder %s141, %s142
      %p156 = scmp.eq.s32.totalorder %s21, 1
      %p157 = por %p155, %p156
      %p159 = scmp.ne.s32.totalorder %s142, %s158
      %p160 = scmp.eq.s32.totalorder %s21, 0
      %p161 = por %p159, %p160
      %s163 = sadd.s32 %s162, 1
      %p166 = scmp.eq.s32.totalorder %s15, 1
      %p167 = scmp.ne.s32.totalorder %s162, %s164
      %p168 = scmp.eq.s32.totalorder %s15, 0
      %p169 = por %p167, %p168
      %p170 = scmp.ne.s32.totalorder %s162, %s164
      %p171 = scmp.eq.s32.totalorder %s20, 1
      %p172 = por %p170, %p171
      %p173 = scmp.ne.s32.totalorder %s164, %s165
      %p174 = scmp.eq.s32.totalorder %s20, 0
      %p175 = por %p173, %p174
      %p176 = scmp.ne.s32.totalorder %s164, %s165
      %p177 = scmp.eq.s32.totalorder %s21, 1
      %p178 = por %p176, %p177
      %p180 = scmp.ne.s32.totalorder %s165, %s179
      %p181 = scmp.eq.s32.totalorder %s21, 0
      %p182 = por %p180, %p181
      %s183 = ssub.s32 %s22, %s34
      %p184 = scmp.eq.s32.totalorder %s183, 0
      %s186 = sadd.s32 %s185, 1
      %s187 = scalar_select %p184, %s185, %s186
      %p190 = pneg %p184
      %p191 = scmp.eq.s32.totalorder %s15, 1
      %p192 = por %p190, %p191
      %p193 = scmp.ne.s32.totalorder %s185, %s188
      %p194 = scmp.eq.s32.totalorder %s15, 0
      %p195 = por %p193, %p194
      %p196 = scmp.ne.s32.totalorder %s185, %s188
      %p197 = scmp.eq.s32.totalorder %s20, 1
      %p198 = por %p196, %p197
      %p199 = scmp.ne.s32.totalorder %s188, %s189
      %p200 = scmp.eq.s32.totalorder %s20, 0
      %p201 = por %p199, %p200
      %p202 = scmp.ne.s32.totalorder %s188, %s189
      %p203 = scmp.eq.s32.totalorder %s21, 1
      %p204 = por %p202, %p203
      %p206 = scmp.ne.s32.totalorder %s189, %s205
      %p207 = scmp.eq.s32.totalorder %s21, 0
      %p208 = por %p206, %p207
      %p209 = scmp.le.s32.totalorder 1, %s15
      %p210 = scmp.lt.s32.totalorder %s15, 3
      %p211 = pnand %p209, %p210
      %p212 = pneg %p211
      // Predicated region
      $region9: #{tpu_custom_call.1} parent=5 // pred_check
        _
      $region10: #{tpu_custom_call.1} parent=5 // pred_check_branch
        %214 = sbr.rel (%p211) target = $region12
      $region11: #{tpu_custom_call.1} parent=5 // pred_region
        %s215 = ssub.s32 %s15, 1
        // Predicated region
        $region13: #{tpu_custom_call.1} parent=11 // pred_check
          %p216 = pneg %p76
        $region14: #{tpu_custom_call.1} parent=11 // pred_check_branch
          %218 = sbr.rel (%p216) target = $region16
        $region15: #{tpu_custom_call.1} parent=11 // pred_region
          _
        $region16: #{tpu_custom_call.1} parent=11 // pred_fallthru
          _
        // Predicated region
        $region17: #{tpu_custom_call.1} parent=11 // pred_check
          %p219 = pneg %p175
        $region18: #{tpu_custom_call.1} parent=11 // pred_check_branch
          %221 = sbr.rel (%p219) target = $region20
        $region19: #{tpu_custom_call.1} parent=11 // pred_region
          _
        $region20: #{tpu_custom_call.1} parent=11 // pred_fallthru
          _
      $region12: #{tpu_custom_call.1} parent=5 // pred_fallthru
        _
      %p222 = scmp.lt.s32.totalorder %s15, 2
      // Predicated region
      $region21: #{tpu_custom_call.1} parent=5 // pred_check
        %p223 = pneg %p222
      $region22: #{tpu_custom_call.1} parent=5 // pred_check_branch
        %225 = sbr.rel (%p223) target = $region24
      $region23: #{tpu_custom_call.1} parent=5 // pred_region
        // Predicated region
        $region25: #{tpu_custom_call.1} parent=23 // pred_check
          %p226 = pneg %p49
        $region26: #{tpu_custom_call.1} parent=23 // pred_check_branch
          %228 = sbr.rel (%p226) target = $region28
        $region27: #{tpu_custom_call.1} parent=23 // pred_region
          %s229 = smul.u32 4, %s22
          %s230 = smul.u32 2, %s23
          %p231 = scmp.lt.s32.totalorder %s229, 7
          %s232 = scalar_select %p231, %s229, 7
          %p233 = scmp.lt.s32.totalorder %s230, 1
          %s234 = scalar_select %p233, %s230, 1
          %s235 = smul.addr %s232, 2
          %s236 = sadd.s32 %s234, %s235
          %s237 = smul.addr %s236, 8
          %s238 = scalar_lea.vmem %s0, %s237
          %s239 = smul.u32 4, %s22
          %s240 = smul.u32 2, %s23
        $region28: #{tpu_custom_call.1} parent=23 // pred_fallthru
          _
        // Predicated region
        $region29: #{tpu_custom_call.1} parent=23 // pred_check
          %p241 = pneg %p96
        $region30: #{tpu_custom_call.1} parent=23 // pred_check_branch
          %243 = sbr.rel (%p241) target = $region32
        $region31: #{tpu_custom_call.1} parent=23 // pred_region
          %s244 = smul.u32 16, %s22
          %p245 = scmp.lt.s32.totalorder %s244, 31
          %s246 = scalar_select %p245, %s244, 31
          %s247 = smul.addr %s246, 8
          %s248 = scalar_lea.vmem %s2, %s247
          %s249 = smul.u32 16, %s22
        $region32: #{tpu_custom_call.1} parent=23 // pred_fallthru
          _
        // Predicated region
        $region33: #{tpu_custom_call.1} parent=23 // pred_check
          %p250 = pneg %p122
        $region34: #{tpu_custom_call.1} parent=23 // pred_check_branch
          %252 = sbr.rel (%p250) target = $region36
        $region35: #{tpu_custom_call.1} parent=23 // pred_region
          %s253 = smul.u32 16, %s22
          %p254 = scmp.lt.s32.totalorder %s253, 31
          %s255 = scalar_select %p254, %s253, 31
          %s256 = smul.addr %s255, 8
          %s257 = scalar_lea.vmem %s3, %s256
          %s258 = smul.u32 16, %s22
        $region36: #{tpu_custom_call.1} parent=23 // pred_fallthru
          _
        // Predicated region
        $region37: #{tpu_custom_call.1} parent=23 // pred_check
          %p259 = pneg %p148
        $region38: #{tpu_custom_call.1} parent=23 // pred_check_branch
          %261 = sbr.rel (%p259) target = $region40
        $region39: #{tpu_custom_call.1} parent=23 // pred_region
          %s262 = smul.u32 16, %s22
          %p263 = scmp.lt.s32.totalorder %s262, 31
          %s264 = scalar_select %p263, %s262, 31
          %s265 = smul.addr %s264, 8
          %s266 = scalar_lea.vmem %s4, %s265
          %s267 = smul.u32 16, %s22
        $region40: #{tpu_custom_call.1} parent=23 // pred_fallthru
          _
      $region24: #{tpu_custom_call.1} parent=5 // pred_fallthru
        _
      %p268 = scmp.le.s32.totalorder 1, %s15
      %p269 = scmp.lt.s32.totalorder %s15, 3
      %p270 = pnand %p268, %p269
      %p271 = pneg %p270
      // Predicated region
      $region41: #{tpu_custom_call.1} parent=5 // pred_check
        _
      $region42: #{tpu_custom_call.1} parent=5 // pred_check_branch
        %273 = sbr.rel (%p270) target = $region44
      $region43: #{tpu_custom_call.1} parent=5 // pred_region
        %s274 = ssub.s32 %s15, 1
        %s275 = smul.u32 4, %s24
        %s276 = smul.u32 2, %s25
        %p277 = scmp.lt.s32.totalorder %s275, 7
        %s278 = scalar_select %p277, %s275, 7
        %p279 = scmp.lt.s32.totalorder %s276, 1
        %s280 = scalar_select %p279, %s276, 1
        %s281 = smul.addr %s278, 2
        %s282 = sadd.s32 %s280, %s281
        %s283 = smul.addr %s282, 8
        %s284 = scalar_lea.vmem %s0, %s283
        %p285 = pneg %p55
        %p286 = pneg %p52
        %p287 = pneg %p76
        %p288 = pneg %p73
        %s289 = smul.u32 16, %s24
        %p290 = scmp.lt.s32.totalorder %s289, 31
        %s291 = scalar_select %p290, %s289, 31
        %s292 = smul.addr %s291, 8
        %s293 = scalar_lea.vmem %s2, %s292
        %p294 = pneg %p102
        %p295 = pneg %p99
        %s296 = smul.u32 16, %s24
        %p297 = scmp.lt.s32.totalorder %s296, 31
        %s298 = scalar_select %p297, %s296, 31
        %s299 = smul.addr %s298, 8
        %s300 = scalar_lea.vmem %s3, %s299
        %p301 = pneg %p128
        %p302 = pneg %p125
        %s303 = smul.u32 16, %s24
        %p304 = scmp.lt.s32.totalorder %s303, 31
        %s305 = scalar_select %p304, %s303, 31
        %s306 = smul.addr %s305, 8
        %s307 = scalar_lea.vmem %s4, %s306
        %p308 = pneg %p154
        %p309 = pneg %p151
        %p310 = pneg %p175
        %p311 = pneg %p172
        %p312 = pneg %p201
        %p313 = pneg %p198
        %s314 = sand.u32 %s188, 1
        %s315 = scalar_lea.sflag [#allocation3], %s314
        %s316 = sand.u32 %s188, 1
        %s317 = smul.addr %s316, 128
        %s318 = scalar_lea.vmem [#allocation2], %s317
        %s319 = smul.u32 4, %s24
        %s320 = smul.u32 2, %s25
        %p321 = scmp.lt.s32.totalorder %s319, 7
        %s322 = scalar_select %p321, %s319, 7
        %p323 = scmp.lt.s32.totalorder %s320, 1
        %s324 = scalar_select %p323, %s320, 1
        %s325 = smul.addr %s322, 2
        %s326 = sadd.s32 %s324, %s325
        %s327 = smul.addr %s326, 8
        %s328 = scalar_lea.vmem %s0, %s327
        %s329 = smul.u32 4, %s24
        %s330 = smul.u32 2, %s25
        %s331 = smul.u32 16, %s24
        %p332 = scmp.lt.s32.totalorder %s331, 31
        %s333 = scalar_select %p332, %s331, 31
        %s334 = smul.addr %s333, 8
        %s335 = scalar_lea.vmem %s2, %s334
        %s336 = smul.u32 16, %s24
        %s337 = smul.u32 16, %s24
        %p338 = scmp.lt.s32.totalorder %s337, 31
        %s339 = scalar_select %p338, %s337, 31
        %s340 = smul.addr %s339, 8
        %s341 = scalar_lea.vmem %s3, %s340
        %s342 = smul.u32 16, %s24
        %s343 = smul.u32 16, %s24
        %p344 = scmp.lt.s32.totalorder %s343, 31
        %s345 = scalar_select %p344, %s343, 31
        %s346 = smul.addr %s345, 8
        %s347 = scalar_lea.vmem %s4, %s346
        %s348 = smul.u32 16, %s24
        %s349 = smul.u32 16, %s24
        %p351 = scmp.eq.s32.totalorder %s25, 0
        // Predicated region
        $region45: #{tpu_custom_call.1} parent=43 // pred_check
          %p352 = pneg %p351
        $region46: #{tpu_custom_call.1} parent=43 // pred_check_branch
          %354 = sbr.rel (%p352) target = $region48
        $region47: #{tpu_custom_call.1} parent=43 // pred_region
          %355 = vst [vmem:[%s318] sm:$0xff] 0.0
          %356 = vst [vmem:[%s318 + $0x8] sm:$0xff] 0.0
          %357 = vst [vmem:[%s318 + $0x10] sm:$0xff] 0.0
          %358 = vst [vmem:[%s318 + $0x18] sm:$0xff] 0.0
          %359 = vst [vmem:[%s318 + $0x20] sm:$0xff] 0.0
          %360 = vst [vmem:[%s318 + $0x28] sm:$0xff] 0.0
          %361 = vst [vmem:[%s318 + $0x30] sm:$0xff] 0.0
          %362 = vst [vmem:[%s318 + $0x38] sm:$0xff] 0.0
          %363 = vst [vmem:[%s318 + $0x40] sm:$0xff] 0.0
          %364 = vst [vmem:[%s318 + $0x48] sm:$0xff] 0.0
          %365 = vst [vmem:[%s318 + $0x50] sm:$0xff] 0.0
          %366 = vst [vmem:[%s318 + $0x58] sm:$0xff] 0.0
          %367 = vst [vmem:[%s318 + $0x60] sm:$0xff] 0.0
          %368 = vst [vmem:[%s318 + $0x68] sm:$0xff] 0.0
          %369 = vst [vmem:[%s318 + $0x70] sm:$0xff] 0.0
          %370 = vst [vmem:[%s318 + $0x78] sm:$0xff] 0.0
        $region48: #{tpu_custom_call.1} parent=43 // pred_fallthru
          _
        %v371 = vld [vmem:[%s328] sm:$0xff]
        %v372 = vld [vmem:[%s328 + $0x8] sm:$0xff]
        %v373 = vld [vmem:[%s328 + $0x10] sm:$0xff]
        %v374 = vld [vmem:[%s328 + $0x18] sm:$0xff]
        %v375 = vld [vmem:[%s328 + $0x20] sm:$0xff]
        %v376 = vld [vmem:[%s328 + $0x28] sm:$0xff]
        %v377 = vld [vmem:[%s328 + $0x30] sm:$0xff]
        %v378 = vld [vmem:[%s328 + $0x38] sm:$0xff]
        %v379 = vunpack.c.l.s8.bf16 %v371
        %v380 = vunpack.c.l.s8.bf16 %v372
        %v381 = vunpack.c.h.s8.bf16 %v371
        %v382 = vunpack.c.h.s8.bf16 %v372
        %v383 = vunpack.c.l.s8.bf16 %v373
        %v384 = vunpack.c.l.s8.bf16 %v374
        %v385 = vunpack.c.h.s8.bf16 %v373
        %v386 = vunpack.c.h.s8.bf16 %v374
        %v387 = vunpack.c.l.s8.bf16 %v375
        %v388 = vunpack.c.l.s8.bf16 %v376
        %v389 = vunpack.c.h.s8.bf16 %v375
        %v390 = vunpack.c.h.s8.bf16 %v376
        %v391 = vunpack.c.l.s8.bf16 %v377
        %v392 = vunpack.c.l.s8.bf16 %v378
        %v393 = vunpack.c.h.s8.bf16 %v377
        %v394 = vunpack.c.h.s8.bf16 %v378
        %s395 = smul.u32 %s25, 32
        %s396 = smul.addr %s395, 4
        %s397 = scalar_lea.vmem %s1, %s396
        %v398 = vld [vmem:[%s397] sm:$0xf]
        %v399 = vld [vmem:[%s397 + $0x4] sm:$0xf]
        %v400 = vld [vmem:[%s397 + $0x8] sm:$0xf]
        %v401 = vld [vmem:[%s397 + $0xc] sm:$0xf]
        %v402 = vld [vmem:[%s397 + $0x10] sm:$0xf]
        %v403 = vld [vmem:[%s397 + $0x14] sm:$0xf]
        %v404 = vld [vmem:[%s397 + $0x18] sm:$0xf]
        %v405 = vld [vmem:[%s397 + $0x1c] sm:$0xf]
        %v406 = vld [vmem:[%s397 + $0x20] sm:$0xf]
        %v407 = vld [vmem:[%s397 + $0x24] sm:$0xf]
        %v408 = vld [vmem:[%s397 + $0x28] sm:$0xf]
        %v409 = vld [vmem:[%s397 + $0x2c] sm:$0xf]
        %v410 = vld [vmem:[%s397 + $0x30] sm:$0xf]
        %v411 = vld [vmem:[%s397 + $0x34] sm:$0xf]
        %v412 = vld [vmem:[%s397 + $0x38] sm:$0xf]
        %v413 = vld [vmem:[%s397 + $0x3c] sm:$0xf]
        %v414 = vld [vmem:[%s397 + $0x40] sm:$0xf]
        %v415 = vld [vmem:[%s397 + $0x44] sm:$0xf]
        %v416 = vld [vmem:[%s397 + $0x48] sm:$0xf]
        %v417 = vld [vmem:[%s397 + $0x4c] sm:$0xf]
        %v418 = vld [vmem:[%s397 + $0x50] sm:$0xf]
        %v419 = vld [vmem:[%s397 + $0x54] sm:$0xf]
        %v420 = vld [vmem:[%s397 + $0x58] sm:$0xf]
        %v421 = vld [vmem:[%s397 + $0x5c] sm:$0xf]
        %v422 = vld [vmem:[%s397 + $0x60] sm:$0xf]
        %v423 = vld [vmem:[%s397 + $0x64] sm:$0xf]
        %v424 = vld [vmem:[%s397 + $0x68] sm:$0xf]
        %v425 = vld [vmem:[%s397 + $0x6c] sm:$0xf]
        %v426 = vld [vmem:[%s397 + $0x70] sm:$0xf]
        %v427 = vld [vmem:[%s397 + $0x74] sm:$0xf]
        %v428 = vld [vmem:[%s397 + $0x78] sm:$0xf]
        %v429 = vld [vmem:[%s397 + $0x7c] sm:$0xf]
        %v430 = vld [vmem:[%s318] sm:$0xff]
        %v431 = vld [vmem:[%s318 + $0x8] sm:$0xff]
        %v432 = vld [vmem:[%s318 + $0x10] sm:$0xff]
        %v433 = vld [vmem:[%s318 + $0x18] sm:$0xff]
        %v434 = vld [vmem:[%s318 + $0x20] sm:$0xff]
        %v435 = vld [vmem:[%s318 + $0x28] sm:$0xff]
        %v436 = vld [vmem:[%s318 + $0x30] sm:$0xff]
        %v437 = vld [vmem:[%s318 + $0x38] sm:$0xff]
        %v438 = vld [vmem:[%s318 + $0x40] sm:$0xff]
        %v439 = vld [vmem:[%s318 + $0x48] sm:$0xff]
        %v440 = vld [vmem:[%s318 + $0x50] sm:$0xff]
        %v441 = vld [vmem:[%s318 + $0x58] sm:$0xff]
        %v442 = vld [vmem:[%s318 + $0x60] sm:$0xff]
        %v443 = vld [vmem:[%s318 + $0x68] sm:$0xff]
        %v444 = vld [vmem:[%s318 + $0x70] sm:$0xff]
        %v445 = vld [vmem:[%s318 + $0x78] sm:$0xff]
        %v478 = vunpack.c.l.b16 %v398
        %v479 = vunpack.c.l.b16 %v399
        %v480 = vunpack.c.l.b16 %v400
        %v481 = vunpack.c.l.b16 %v401
        %v482 = vunpack.c.l.b16 %v402
        %v483 = vunpack.c.l.b16 %v403
        %v484 = vunpack.c.l.b16 %v404
        %v485 = vunpack.c.l.b16 %v405
        %v486 = vunpack.c.l.b16 %v406
        %v487 = vunpack.c.l.b16 %v407
        %v488 = vunpack.c.l.b16 %v408
        %v489 = vunpack.c.l.b16 %v409
        %v490 = vunpack.c.l.b16 %v410
        %v491 = vunpack.c.l.b16 %v411
        %v492 = vunpack.c.l.b16 %v412
        %v493 = vunpack.c.l.b16 %v413
        %v494 = vunpack.c.l.b16 %v414
        %v495 = vunpack.c.l.b16 %v415
        %v496 = vunpack.c.l.b16 %v416
        %v497 = vunpack.c.l.b16 %v417
        %v498 = vunpack.c.l.b16 %v418
        %v499 = vunpack.c.l.b16 %v419
        %v500 = vunpack.c.l.b16 %v420
        %v501 = vunpack.c.l.b16 %v421
        %v502 = vunpack.c.l.b16 %v422
        %v503 = vunpack.c.l.b16 %v423
        %v504 = vunpack.c.l.b16 %v424
        %v505 = vunpack.c.l.b16 %v425
        %v506 = vunpack.c.l.b16 %v426
        %v507 = vunpack.c.l.b16 %v427
        %v508 = vunpack.c.l.b16 %v428
        %v509 = vunpack.c.l.b16 %v429
        %v510 = vpack.c.b16 %v479, %v478
        %v511 = vpack.c.b16 %v481, %v480
        %v512 = vpack.c.b16 %v483, %v482
        %v513 = vpack.c.b16 %v485, %v484
        %v514 = vpack.c.b16 %v487, %v486
        %v515 = vpack.c.b16 %v489, %v488
        %v516 = vpack.c.b16 %v491, %v490
        %v517 = vpack.c.b16 %v493, %v492
        %v518 = vpack.c.b16 %v495, %v494
        %v519 = vpack.c.b16 %v497, %v496
        %v520 = vpack.c.b16 %v499, %v498
        %v521 = vpack.c.b16 %v501, %v500
        %v522 = vpack.c.b16 %v503, %v502
        %v523 = vpack.c.b16 %v505, %v504
        %v524 = vpack.c.b16 %v507, %v506
        %v525 = vpack.c.b16 %v509, %v508
        %542 = vmatprep.subr.bf16.mxu0 0
        %543 = vmatpush1.bf16.msra.mxu0 %v510
        %544 = vmatprep.subr.bf16.mxu0 0
        %545 = vmatpush1.bf16.msra.mxu0 %v511
        %546 = vmatprep.subr.bf16.mxu0 0
        %547 = vmatpush1.bf16.msra.mxu0 %v512
        %548 = vmatprep.subr.bf16.mxu0 0
        %549 = vmatpush1.bf16.msra.mxu0 %v513
        %550 = vmatprep.subr.bf16.mxu0 0
        %551 = vmatpush1.bf16.msra.mxu0 %v514
        %552 = vmatprep.subr.bf16.mxu0 0
        %553 = vmatpush1.bf16.msra.mxu0 %v515
        %554 = vmatprep.subr.bf16.mxu0 0
        %555 = vmatpush1.bf16.msra.mxu0 %v516
        %556 = vmatprep.subr.bf16.mxu0 0
        %557 = vmatpush1.bf16.msra.mxu0 %v517
        %558 = vmatprep.subr.bf16.mxu0 0
        %559 = vmatpush1.bf16.msra.mxu0 %v518
        %560 = vmatprep.subr.bf16.mxu0 0
        %561 = vmatpush1.bf16.msra.mxu0 %v519
        %562 = vmatprep.subr.bf16.mxu0 0
        %563 = vmatpush1.bf16.msra.mxu0 %v520
        %564 = vmatprep.subr.bf16.mxu0 0
        %565 = vmatpush1.bf16.msra.mxu0 %v521
        %566 = vmatprep.subr.bf16.mxu0 0
        %567 = vmatpush1.bf16.msra.mxu0 %v522
        %568 = vmatprep.subr.bf16.mxu0 0
        %569 = vmatpush1.bf16.msra.mxu0 %v523
        %570 = vmatprep.subr.bf16.mxu0 0
        %571 = vmatpush1.bf16.msra.mxu0 %v524
        %572 = vmatprep.subr.bf16.mxu0 0
        %573 = vmatpush1.bf16.msra.mxu0 %v525
        %574 = vmatprep.mubr.bf16.mxu0 %v380
        %575 = vmatmul.mubr.bf16.gmra.mrb[0].mxu0 %v379
        %v576 = vpop.f32.mrb[0].mxu0
        %v577 = vadd.f32 0.0, %v576
        %v578 = vpop.f32.mrb[0].mxu0
        %v579 = vpop.f32.mrb[0].mxu0
        %v580 = vadd.f32 0.0, %v579
        %v581 = vpop.f32.mrb[0].mxu0
        %582 = vmatprep.mubr.bf16.mxu0 %v382
        %583 = vmatmul.mubr.bf16.gmra.mrb[0].mxu0 %v381
        %v584 = vpop.f32.mrb[0].mxu0
        %v585 = vadd.f32 0.0, %v584
        %v586 = vpop.f32.mrb[0].mxu0
        %v587 = vpop.f32.mrb[0].mxu0
        %v588 = vadd.f32 0.0, %v587
        %v589 = vpop.f32.mrb[0].mxu0
        %590 = vmatprep.mubr.bf16.mxu0 %v384
        %591 = vmatmul.mubr.bf16.gmra.mrb[0].mxu0 %v383
        %v592 = vpop.f32.mrb[0].mxu0
        %v593 = vadd.f32 0.0, %v592
        %v594 = vpop.f32.mrb[0].mxu0
        %v595 = vpop.f32.mrb[0].mxu0
        %v596 = vadd.f32 0.0, %v595
        %v597 = vpop.f32.mrb[0].mxu0
        %598 = vmatprep.mubr.bf16.mxu0 %v386
        %599 = vmatmul.mubr.bf16.gmra.mrb[0].mxu0 %v385
        %v600 = vpop.f32.mrb[0].mxu0
        %v601 = vadd.f32 0.0, %v600
        %v602 = vpop.f32.mrb[0].mxu0
        %v603 = vpop.f32.mrb[0].mxu0
        %v604 = vadd.f32 0.0, %v603
        %v605 = vpop.f32.mrb[0].mxu0
        %606 = vmatprep.mubr.bf16.mxu0 %v388
        %607 = vmatmul.mubr.bf16.gmra.mrb[0].mxu0 %v387
        %v608 = vpop.f32.mrb[0].mxu0
        %v609 = vadd.f32 0.0, %v608
        %v610 = vpop.f32.mrb[0].mxu0
        %v611 = vpop.f32.mrb[0].mxu0
        %v612 = vadd.f32 0.0, %v611
        %v613 = vpop.f32.mrb[0].mxu0
        %614 = vmatprep.mubr.bf16.mxu0 %v390
        %615 = vmatmul.mubr.bf16.gmra.mrb[0].mxu0 %v389
        %v616 = vpop.f32.mrb[0].mxu0
        %v617 = vadd.f32 0.0, %v616
        %v618 = vpop.f32.mrb[0].mxu0
        %v619 = vpop.f32.mrb[0].mxu0
        %v620 = vadd.f32 0.0, %v619
        %v621 = vpop.f32.mrb[0].mxu0
        %622 = vmatprep.mubr.bf16.mxu0 %v392
        %623 = vmatmul.mubr.bf16.gmra.mrb[0].mxu0 %v391
        %v624 = vpop.f32.mrb[0].mxu0
        %v625 = vadd.f32 0.0, %v624
        %v626 = vpop.f32.mrb[0].mxu0
        %v627 = vpop.f32.mrb[0].mxu0
        %v628 = vadd.f32 0.0, %v627
        %v629 = vpop.f32.mrb[0].mxu0
        %630 = vmatprep.mubr.bf16.mxu0 %v394
        %631 = vmatmul.mubr.bf16.gmra.mrb[0].mxu0 %v393
        %v632 = vpop.f32.mrb[0].mxu0
        %v633 = vadd.f32 0.0, %v632
        %v634 = vpop.f32.mrb[0].mxu0
        %v635 = vpop.f32.mrb[0].mxu0
        %v636 = vadd.f32 0.0, %v635
        %v637 = vpop.f32.mrb[0].mxu0
        %638 = vdwg.mxu0
        %v639 = vadd.f32 %v430, %v577
        %v640 = vadd.f32 %v431, %v580
        %v641 = vadd.f32 %v432, %v585
        %v642 = vadd.f32 %v433, %v588
        %v643 = vadd.f32 %v434, %v593
        %v644 = vadd.f32 %v435, %v596
        %v645 = vadd.f32 %v436, %v601
        %v646 = vadd.f32 %v437, %v604
        %v647 = vadd.f32 %v438, %v609
        %v648 = vadd.f32 %v439, %v612
        %v649 = vadd.f32 %v440, %v617
        %v650 = vadd.f32 %v441, %v620
        %v651 = vadd.f32 %v442, %v625
        %v652 = vadd.f32 %v443, %v628
        %v653 = vadd.f32 %v444, %v633
        %v654 = vadd.f32 %v445, %v636
        %655 = vst [vmem:[%s318] sm:$0xff] %v639
        %656 = vst [vmem:[%s318 + $0x8] sm:$0xff] %v640
        %657 = vst [vmem:[%s318 + $0x10] sm:$0xff] %v641
        %658 = vst [vmem:[%s318 + $0x18] sm:$0xff] %v642
        %659 = vst [vmem:[%s318 + $0x20] sm:$0xff] %v643
        %660 = vst [vmem:[%s318 + $0x28] sm:$0xff] %v644
        %661 = vst [vmem:[%s318 + $0x30] sm:$0xff] %v645
        %662 = vst [vmem:[%s318 + $0x38] sm:$0xff] %v646
        %663 = vst [vmem:[%s318 + $0x40] sm:$0xff] %v647
        %664 = vst [vmem:[%s318 + $0x48] sm:$0xff] %v648
        %665 = vst [vmem:[%s318 + $0x50] sm:$0xff] %v649
        %666 = vst [vmem:[%s318 + $0x58] sm:$0xff] %v650
        %667 = vst [vmem:[%s318 + $0x60] sm:$0xff] %v651
        %668 = vst [vmem:[%s318 + $0x68] sm:$0xff] %v652
        %669 = vst [vmem:[%s318 + $0x70] sm:$0xff] %v653
        %670 = vst [vmem:[%s318 + $0x78] sm:$0xff] %v654
        // Predicated region
        $region49: #{tpu_custom_call.1} parent=43 // pred_check
          %p671 = pneg %p351
        $region50: #{tpu_custom_call.1} parent=43 // pred_check_branch
          %673 = sbr.rel (%p671) target = $region52
        $region51: #{tpu_custom_call.1} parent=43 // pred_region
          %v674 = vld [vmem:[%s335] sm:$0xff]
          %v675 = vld [vmem:[%s335 + $0x8] sm:$0xff]
          %v676 = vld [vmem:[%s335 + $0x10] sm:$0xff]
          %v677 = vld [vmem:[%s335 + $0x18] sm:$0xff]
          %v678 = vld [vmem:[%s335 + $0x20] sm:$0xff]
          %v679 = vld [vmem:[%s335 + $0x28] sm:$0xff]
          %v680 = vld [vmem:[%s335 + $0x30] sm:$0xff]
          %v681 = vld [vmem:[%s335 + $0x38] sm:$0xff]
          %v682 = vld [vmem:[%s335 + $0x40] sm:$0xff]
          %v683 = vld [vmem:[%s335 + $0x48] sm:$0xff]
          %v684 = vld [vmem:[%s335 + $0x50] sm:$0xff]
          %v685 = vld [vmem:[%s335 + $0x58] sm:$0xff]
          %v686 = vld [vmem:[%s335 + $0x60] sm:$0xff]
          %v687 = vld [vmem:[%s335 + $0x68] sm:$0xff]
          %v688 = vld [vmem:[%s335 + $0x70] sm:$0xff]
          %v689 = vld [vmem:[%s335 + $0x78] sm:$0xff]
          %v690 = vld [vmem:[%s318] sm:$0xff]
          %v691 = vld [vmem:[%s318 + $0x8] sm:$0xff]
          %v692 = vld [vmem:[%s318 + $0x10] sm:$0xff]
          %v693 = vld [vmem:[%s318 + $0x18] sm:$0xff]
          %v694 = vld [vmem:[%s318 + $0x20] sm:$0xff]
          %v695 = vld [vmem:[%s318 + $0x28] sm:$0xff]
          %v696 = vld [vmem:[%s318 + $0x30] sm:$0xff]
          %v697 = vld [vmem:[%s318 + $0x38] sm:$0xff]
          %v698 = vld [vmem:[%s318 + $0x40] sm:$0xff]
          %v699 = vld [vmem:[%s318 + $0x48] sm:$0xff]
          %v700 = vld [vmem:[%s318 + $0x50] sm:$0xff]
          %v701 = vld [vmem:[%s318 + $0x58] sm:$0xff]
          %v702 = vld [vmem:[%s318 + $0x60] sm:$0xff]
          %v703 = vld [vmem:[%s318 + $0x68] sm:$0xff]
          %v704 = vld [vmem:[%s318 + $0x70] sm:$0xff]
          %v705 = vld [vmem:[%s318 + $0x78] sm:$0xff]
          %707 = vset.pattern.permute.xlu0 0
          %708 = vperm.xlu0 %707, %v674
          %v709 = vpop.permute.xlu0 %708
          %712 = vset.pattern.permute.xlu0 0
          %713 = vperm.xlu0 %712, %v675
          %v714 = vpop.permute.xlu0 %713
          %717 = vset.pattern.permute.xlu0 0
          %718 = vperm.xlu0 %717, %v676
          %v719 = vpop.permute.xlu0 %718
          %722 = vset.pattern.permute.xlu0 0
          %723 = vperm.xlu0 %722, %v677
          %v724 = vpop.permute.xlu0 %723
          %727 = vset.pattern.permute.xlu0 0
          %728 = vperm.xlu0 %727, %v678
          %v729 = vpop.permute.xlu0 %728
          %732 = vset.pattern.permute.xlu0 0
          %733 = vperm.xlu0 %732, %v679
          %v734 = vpop.permute.xlu0 %733
          %737 = vset.pattern.permute.xlu0 0
          %738 = vperm.xlu0 %737, %v680
          %v739 = vpop.permute.xlu0 %738
          %742 = vset.pattern.permute.xlu0 0
          %743 = vperm.xlu0 %742, %v681
          %v744 = vpop.permute.xlu0 %743
          %747 = vset.pattern.permute.xlu0 0
          %748 = vperm.xlu0 %747, %v682
          %v749 = vpop.permute.xlu0 %748
          %752 = vset.pattern.permute.xlu0 0
          %753 = vperm.xlu0 %752, %v683
          %v754 = vpop.permute.xlu0 %753
          %757 = vset.pattern.permute.xlu0 0
          %758 = vperm.xlu0 %757, %v684
          %v759 = vpop.permute.xlu0 %758
          %762 = vset.pattern.permute.xlu0 0
          %763 = vperm.xlu0 %762, %v685
          %v764 = vpop.permute.xlu0 %763
          %767 = vset.pattern.permute.xlu0 0
          %768 = vperm.xlu0 %767, %v686
          %v769 = vpop.permute.xlu0 %768
          %772 = vset.pattern.permute.xlu0 0
          %773 = vperm.xlu0 %772, %v687
          %v774 = vpop.permute.xlu0 %773
          %777 = vset.pattern.permute.xlu0 0
          %778 = vperm.xlu0 %777, %v688
          %v779 = vpop.permute.xlu0 %778
          %782 = vset.pattern.permute.xlu0 0
          %783 = vperm.xlu0 %782, %v689
          %v784 = vpop.permute.xlu0 %783
          %v786 = vmul.f32 %v690, %v709
          %v787 = vmul.f32 %v691, %v714
          %v788 = vmul.f32 %v692, %v719
          %v789 = vmul.f32 %v693, %v724
          %v790 = vmul.f32 %v694, %v729
          %v791 = vmul.f32 %v695, %v734
          %v792 = vmul.f32 %v696, %v739
          %v793 = vmul.f32 %v697, %v744
          %v794 = vmul.f32 %v698, %v749
          %v795 = vmul.f32 %v699, %v754
          %v796 = vmul.f32 %v700, %v759
          %v797 = vmul.f32 %v701, %v764
          %v798 = vmul.f32 %v702, %v769
          %v799 = vmul.f32 %v703, %v774
          %v800 = vmul.f32 %v704, %v779
          %v801 = vmul.f32 %v705, %v784
          %v802 = vld [vmem:[%s341] sm:$0xff]
          %v803 = vld [vmem:[%s341 + $0x8] sm:$0xff]
          %v804 = vld [vmem:[%s341 + $0x10] sm:$0xff]
          %v805 = vld [vmem:[%s341 + $0x18] sm:$0xff]
          %v806 = vld [vmem:[%s341 + $0x20] sm:$0xff]
          %v807 = vld [vmem:[%s341 + $0x28] sm:$0xff]
          %v808 = vld [vmem:[%s341 + $0x30] sm:$0xff]
          %v809 = vld [vmem:[%s341 + $0x38] sm:$0xff]
          %v810 = vld [vmem:[%s341 + $0x40] sm:$0xff]
          %v811 = vld [vmem:[%s341 + $0x48] sm:$0xff]
          %v812 = vld [vmem:[%s341 + $0x50] sm:$0xff]
          %v813 = vld [vmem:[%s341 + $0x58] sm:$0xff]
          %v814 = vld [vmem:[%s341 + $0x60] sm:$0xff]
          %v815 = vld [vmem:[%s341 + $0x68] sm:$0xff]
          %v816 = vld [vmem:[%s341 + $0x70] sm:$0xff]
          %v817 = vld [vmem:[%s341 + $0x78] sm:$0xff]
          %v818 = vld [vmem:[%s5] sm:$0x1]
          %v820 = vlaneseq
          %v821 = vshrl.u32 %v820, 7
          %v822 = vsub.s32 0, %v821
          %v823 = vrot.slane %v818, %v822
          %v825 = vmul.f32 %v786, %v823
          %v826 = vmul.f32 %v787, %v823
          %v827 = vmul.f32 %v788, %v823
          %v828 = vmul.f32 %v789, %v823
          %v829 = vmul.f32 %v790, %v823
          %v830 = vmul.f32 %v791, %v823
          %v831 = vmul.f32 %v792, %v823
          %v832 = vmul.f32 %v793, %v823
          %v833 = vmul.f32 %v794, %v823
          %v834 = vmul.f32 %v795, %v823
          %v835 = vmul.f32 %v796, %v823
          %v836 = vmul.f32 %v797, %v823
          %v837 = vmul.f32 %v798, %v823
          %v838 = vmul.f32 %v799, %v823
          %v839 = vmul.f32 %v800, %v823
          %v840 = vmul.f32 %v801, %v823
          %841 = vadd.xlane.f32.xlu0 %v825
          %v842 = vpop.xlane.xlu0 %841
          %843 = vadd.xlane.f32.xlu0 %v826
          %v844 = vpop.xlane.xlu0 %843
          %845 = vadd.xlane.f32.xlu0 %v827
          %v846 = vpop.xlane.xlu0 %845
          %847 = vadd.xlane.f32.xlu0 %v828
          %v848 = vpop.xlane.xlu0 %847
          %849 = vadd.xlane.f32.xlu0 %v829
          %v850 = vpop.xlane.xlu0 %849
          %851 = vadd.xlane.f32.xlu0 %v830
          %v852 = vpop.xlane.xlu0 %851
          %853 = vadd.xlane.f32.xlu0 %v831
          %v854 = vpop.xlane.xlu0 %853
          %855 = vadd.xlane.f32.xlu0 %v832
          %v856 = vpop.xlane.xlu0 %855
          %857 = vadd.xlane.f32.xlu0 %v833
          %v858 = vpop.xlane.xlu0 %857
          %859 = vadd.xlane.f32.xlu0 %v834
          %v860 = vpop.xlane.xlu0 %859
          %861 = vadd.xlane.f32.xlu0 %v835
          %v862 = vpop.xlane.xlu0 %861
          %863 = vadd.xlane.f32.xlu0 %v836
          %v864 = vpop.xlane.xlu0 %863
          %865 = vadd.xlane.f32.xlu0 %v837
          %v866 = vpop.xlane.xlu0 %865
          %867 = vadd.xlane.f32.xlu0 %v838
          %v868 = vpop.xlane.xlu0 %867
          %869 = vadd.xlane.f32.xlu0 %v839
          %v870 = vpop.xlane.xlu0 %869
          %871 = vadd.xlane.f32.xlu0 %v840
          %v872 = vpop.xlane.xlu0 %871
          %v873 = vadd.f32 %v802, %v842
          %v874 = vadd.f32 %v803, %v844
          %v875 = vadd.f32 %v804, %v846
          %v876 = vadd.f32 %v805, %v848
          %v877 = vadd.f32 %v806, %v850
          %v878 = vadd.f32 %v807, %v852
          %v879 = vadd.f32 %v808, %v854
          %v880 = vadd.f32 %v809, %v856
          %v881 = vadd.f32 %v810, %v858
          %v882 = vadd.f32 %v811, %v860
          %v883 = vadd.f32 %v812, %v862
          %v884 = vadd.f32 %v813, %v864
          %v885 = vadd.f32 %v814, %v866
          %v886 = vadd.f32 %v815, %v868
          %v887 = vadd.f32 %v816, %v870
          %v888 = vadd.f32 %v817, %v872
          %v889 = vxor.u32 %v873, 2147483648
          %v890 = vxor.u32 %v874, 2147483648
          %v891 = vxor.u32 %v875, 2147483648
          %v892 = vxor.u32 %v876, 2147483648
          %v893 = vxor.u32 %v877, 2147483648
          %v894 = vxor.u32 %v878, 2147483648
          %v895 = vxor.u32 %v879, 2147483648
          %v896 = vxor.u32 %v880, 2147483648
          %v897 = vxor.u32 %v881, 2147483648
          %v898 = vxor.u32 %v882, 2147483648
          %v899 = vxor.u32 %v883, 2147483648
          %v900 = vxor.u32 %v884, 2147483648
          %v901 = vxor.u32 %v885, 2147483648
          %v902 = vxor.u32 %v886, 2147483648
          %v903 = vxor.u32 %v887, 2147483648
          %v904 = vxor.u32 %v888, 2147483648
          %v905 = vmul.f32 %v889, 1.442695
          %v906 = vpow.pop %v905
          %v907 = vmul.f32 %v890, 1.442695
          %v908 = vpow.pop %v907
          %v909 = vmul.f32 %v891, 1.442695
          %v910 = vpow.pop %v909
          %v911 = vmul.f32 %v892, 1.442695
          %v912 = vpow.pop %v911
          %v913 = vmul.f32 %v893, 1.442695
          %v914 = vpow.pop %v913
          %v915 = vmul.f32 %v894, 1.442695
          %v916 = vpow.pop %v915
          %v917 = vmul.f32 %v895, 1.442695
          %v918 = vpow.pop %v917
          %v919 = vmul.f32 %v896, 1.442695
          %v920 = vpow.pop %v919
          %v921 = vmul.f32 %v897, 1.442695
          %v922 = vpow.pop %v921
          %v923 = vmul.f32 %v898, 1.442695
          %v924 = vpow.pop %v923
          %v925 = vmul.f32 %v899, 1.442695
          %v926 = vpow.pop %v925
          %v927 = vmul.f32 %v900, 1.442695
          %v928 = vpow.pop %v927
          %v929 = vmul.f32 %v901, 1.442695
          %v930 = vpow.pop %v929
          %v931 = vmul.f32 %v902, 1.442695
          %v932 = vpow.pop %v931
          %v933 = vmul.f32 %v903, 1.442695
          %v934 = vpow.pop %v933
          %v935 = vmul.f32 %v904, 1.442695
          %v936 = vpow.pop %v935
          %v937 = vadd.f32 %v906, 1.0
          %v938 = vadd.f32 %v908, 1.0
          %v939 = vadd.f32 %v910, 1.0
          %v940 = vadd.f32 %v912, 1.0
          %v941 = vadd.f32 %v914, 1.0
          %v942 = vadd.f32 %v916, 1.0
          %v943 = vadd.f32 %v918, 1.0
          %v944 = vadd.f32 %v920, 1.0
          %v945 = vadd.f32 %v922, 1.0
          %v946 = vadd.f32 %v924, 1.0
          %v947 = vadd.f32 %v926, 1.0
          %v948 = vadd.f32 %v928, 1.0
          %v949 = vadd.f32 %v930, 1.0
          %v950 = vadd.f32 %v932, 1.0
          %v951 = vadd.f32 %v934, 1.0
          %v952 = vadd.f32 %v936, 1.0
          %v953 = vrcp.pop %v937
          %v954 = vmul.f32 1.0, %v953
          %v955 = vrcp.pop %v938
          %v956 = vmul.f32 1.0, %v955
          %v957 = vrcp.pop %v939
          %v958 = vmul.f32 1.0, %v957
          %v959 = vrcp.pop %v940
          %v960 = vmul.f32 1.0, %v959
          %v961 = vrcp.pop %v941
          %v962 = vmul.f32 1.0, %v961
          %v963 = vrcp.pop %v942
          %v964 = vmul.f32 1.0, %v963
          %v965 = vrcp.pop %v943
          %v966 = vmul.f32 1.0, %v965
          %v967 = vrcp.pop %v944
          %v968 = vmul.f32 1.0, %v967
          %v969 = vrcp.pop %v945
          %v970 = vmul.f32 1.0, %v969
          %v971 = vrcp.pop %v946
          %v972 = vmul.f32 1.0, %v971
          %v973 = vrcp.pop %v947
          %v974 = vmul.f32 1.0, %v973
          %v975 = vrcp.pop %v948
          %v976 = vmul.f32 1.0, %v975
          %v977 = vrcp.pop %v949
          %v978 = vmul.f32 1.0, %v977
          %v979 = vrcp.pop %v950
          %v980 = vmul.f32 1.0, %v979
          %v981 = vrcp.pop %v951
          %v982 = vmul.f32 1.0, %v981
          %v983 = vrcp.pop %v952
          %v984 = vmul.f32 1.0, %v983
          %986 = vset.pattern.permute.xlu0 0
          %987 = vperm.xlu0 %986, %v954
          %v988 = vpop.permute.xlu0 %987
          %991 = vset.pattern.permute.xlu0 0
          %992 = vperm.xlu0 %991, %v956
          %v993 = vpop.permute.xlu0 %992
          %996 = vset.pattern.permute.xlu0 0
          %997 = vperm.xlu0 %996, %v958
          %v998 = vpop.permute.xlu0 %997
          %1001 = vset.pattern.permute.xlu0 0
          %1002 = vperm.xlu0 %1001, %v960
          %v1003 = vpop.permute.xlu0 %1002
          %1006 = vset.pattern.permute.xlu0 0
          %1007 = vperm.xlu0 %1006, %v962
          %v1008 = vpop.permute.xlu0 %1007
          %1011 = vset.pattern.permute.xlu0 0
          %1012 = vperm.xlu0 %1011, %v964
          %v1013 = vpop.permute.xlu0 %1012
          %1016 = vset.pattern.permute.xlu0 0
          %1017 = vperm.xlu0 %1016, %v966
          %v1018 = vpop.permute.xlu0 %1017
          %1021 = vset.pattern.permute.xlu0 0
          %1022 = vperm.xlu0 %1021, %v968
          %v1023 = vpop.permute.xlu0 %1022
          %1026 = vset.pattern.permute.xlu0 0
          %1027 = vperm.xlu0 %1026, %v970
          %v1028 = vpop.permute.xlu0 %1027
          %1031 = vset.pattern.permute.xlu0 0
          %1032 = vperm.xlu0 %1031, %v972
          %v1033 = vpop.permute.xlu0 %1032
          %1036 = vset.pattern.permute.xlu0 0
          %1037 = vperm.xlu0 %1036, %v974
          %v1038 = vpop.permute.xlu0 %1037
          %1041 = vset.pattern.permute.xlu0 0
          %1042 = vperm.xlu0 %1041, %v976
          %v1043 = vpop.permute.xlu0 %1042
          %1046 = vset.pattern.permute.xlu0 0
          %1047 = vperm.xlu0 %1046, %v978
          %v1048 = vpop.permute.xlu0 %1047
          %1051 = vset.pattern.permute.xlu0 0
          %1052 = vperm.xlu0 %1051, %v980
          %v1053 = vpop.permute.xlu0 %1052
          %1056 = vset.pattern.permute.xlu0 0
          %1057 = vperm.xlu0 %1056, %v982
          %v1058 = vpop.permute.xlu0 %1057
          %1061 = vset.pattern.permute.xlu0 0
          %1062 = vperm.xlu0 %1061, %v984
          %v1063 = vpop.permute.xlu0 %1062
          %v1065 = vmul.f32 %v988, %v786
          %v1066 = vmul.f32 %v993, %v787
          %v1067 = vmul.f32 %v998, %v788
          %v1068 = vmul.f32 %v1003, %v789
          %v1069 = vmul.f32 %v1008, %v790
          %v1070 = vmul.f32 %v1013, %v791
          %v1071 = vmul.f32 %v1018, %v792
          %v1072 = vmul.f32 %v1023, %v793
          %v1073 = vmul.f32 %v1028, %v794
          %v1074 = vmul.f32 %v1033, %v795
          %v1075 = vmul.f32 %v1038, %v796
          %v1076 = vmul.f32 %v1043, %v797
          %v1077 = vmul.f32 %v1048, %v798
          %v1078 = vmul.f32 %v1053, %v799
          %v1079 = vmul.f32 %v1058, %v800
          %v1080 = vmul.f32 %v1063, %v801
          %v1081 = vld [vmem:[%s347] sm:$0xff]
          %v1082 = vld [vmem:[%s347 + $0x8] sm:$0xff]
          %v1083 = vld [vmem:[%s347 + $0x10] sm:$0xff]
          %v1084 = vld [vmem:[%s347 + $0x18] sm:$0xff]
          %v1085 = vld [vmem:[%s347 + $0x20] sm:$0xff]
          %v1086 = vld [vmem:[%s347 + $0x28] sm:$0xff]
          %v1087 = vld [vmem:[%s347 + $0x30] sm:$0xff]
          %v1088 = vld [vmem:[%s347 + $0x38] sm:$0xff]
          %v1089 = vld [vmem:[%s347 + $0x40] sm:$0xff]
          %v1090 = vld [vmem:[%s347 + $0x48] sm:$0xff]
          %v1091 = vld [vmem:[%s347 + $0x50] sm:$0xff]
          %v1092 = vld [vmem:[%s347 + $0x58] sm:$0xff]
          %v1093 = vld [vmem:[%s347 + $0x60] sm:$0xff]
          %v1094 = vld [vmem:[%s347 + $0x68] sm:$0xff]
          %v1095 = vld [vmem:[%s347 + $0x70] sm:$0xff]
          %v1096 = vld [vmem:[%s347 + $0x78] sm:$0xff]
          %v1097 = vadd.f32 %v1065, %v1081
          %v1098 = vadd.f32 %v1066, %v1082
          %v1099 = vadd.f32 %v1067, %v1083
          %v1100 = vadd.f32 %v1068, %v1084
          %v1101 = vadd.f32 %v1069, %v1085
          %v1102 = vadd.f32 %v1070, %v1086
          %v1103 = vadd.f32 %v1071, %v1087
          %v1104 = vadd.f32 %v1072, %v1088
          %v1105 = vadd.f32 %v1073, %v1089
          %v1106 = vadd.f32 %v1074, %v1090
          %v1107 = vadd.f32 %v1075, %v1091
          %v1108 = vadd.f32 %v1076, %v1092
          %v1109 = vadd.f32 %v1077, %v1093
          %v1110 = vadd.f32 %v1078, %v1094
          %v1111 = vadd.f32 %v1079, %v1095
          %v1112 = vadd.f32 %v1080, %v1096
          %1113 = vst [vmem:[%s318] sm:$0xff] %v1097
          %1114 = vst [vmem:[%s318 + $0x8] sm:$0xff] %v1098
          %1115 = vst [vmem:[%s318 + $0x10] sm:$0xff] %v1099
          %1116 = vst [vmem:[%s318 + $0x18] sm:$0xff] %v1100
          %1117 = vst [vmem:[%s318 + $0x20] sm:$0xff] %v1101
          %1118 = vst [vmem:[%s318 + $0x28] sm:$0xff] %v1102
          %1119 = vst [vmem:[%s318 + $0x30] sm:$0xff] %v1103
          %1120 = vst [vmem:[%s318 + $0x38] sm:$0xff] %v1104
          %1121 = vst [vmem:[%s318 + $0x40] sm:$0xff] %v1105
          %1122 = vst [vmem:[%s318 + $0x48] sm:$0xff] %v1106
          %1123 = vst [vmem:[%s318 + $0x50] sm:$0xff] %v1107
          %1124 = vst [vmem:[%s318 + $0x58] sm:$0xff] %v1108
          %1125 = vst [vmem:[%s318 + $0x60] sm:$0xff] %v1109
          %1126 = vst [vmem:[%s318 + $0x68] sm:$0xff] %v1110
          %1127 = vst [vmem:[%s318 + $0x70] sm:$0xff] %v1111
          %1128 = vst [vmem:[%s318 + $0x78] sm:$0xff] %v1112
        $region52: #{tpu_custom_call.1} parent=43 // pred_fallthru
          _
        %s1129 = sand.u32 %s188, 1
        %s1130 = scalar_lea.sflag [#allocation3], %s1129
        %s1131 = sand.u32 %s188, 1
        %s1132 = smul.addr %s1131, 128
        %s1133 = scalar_lea.vmem [#allocation2], %s1132
        // Predicated region
        $region53: #{tpu_custom_call.1} parent=43 // pred_check
          %p1134 = pneg %p198
        $region54: #{tpu_custom_call.1} parent=43 // pred_check_branch
          %1136 = sbr.rel (%p1134) target = $region56
        $region55: #{tpu_custom_call.1} parent=43 // pred_region
          %s1137 = smul.u32 16, %s24
          %s1139 = ssub.s32 2048, 2048
          %1140 = vsyncadd %s1130, %s1139
          %s1141 = smul.addr %s1137, 128
          %s1142 = scalar_lea.hbm %s6, %s1141
          %s1143 = sshll.u32 %s1133, 4
          %s1144 = int_to_ptr.vmem [resolvable:$true] %s1143
          %1149 = dma.vmem_to_hbm [thread:$0]  %s1144, 2048, %s1142, %s1130, 128, 128, 8
        $region56: #{tpu_custom_call.1} parent=43 // pred_fallthru
          _
      $region44: #{tpu_custom_call.1} parent=5 // pred_fallthru
        _
      %p1150 = scmp.le.s32.totalorder 2, %s15
      // Predicated region
      $region57: #{tpu_custom_call.1} parent=5 // pred_check
        %p1151 = pneg %p1150
      $region58: #{tpu_custom_call.1} parent=5 // pred_check_branch
        %1153 = sbr.rel (%p1151) target = $region60
      $region59: #{tpu_custom_call.1} parent=5 // pred_region
        %s1154 = ssub.s32 %s15, 2
        // Predicated region
        $region61: #{tpu_custom_call.1} parent=59 // pred_check
          %p1155 = pneg %p204
        $region62: #{tpu_custom_call.1} parent=59 // pred_check_branch
          %1157 = sbr.rel (%p1155) target = $region64
        $region63: #{tpu_custom_call.1} parent=59 // pred_region
          %s1158 = sand.u32 %s189, 1
          %s1159 = scalar_lea.sflag [#allocation3], %s1158
          %s1160 = sand.u32 %s189, 1
          %s1161 = smul.addr %s1160, 128
          %s1162 = scalar_lea.vmem [#allocation2], %s1161
          %1163 = dma.done %s1159, 2048
        $region64: #{tpu_custom_call.1} parent=59 // pred_fallthru
          _
      $region60: #{tpu_custom_call.1} parent=5 // pred_fallthru
        _
    $region6: #{tpu_custom_call.1} parent=1 // loop_footer
      %s19 = sadd.s32 1, %s15
    $region7: #{tpu_custom_call.1} parent=1 // loop_footer_branch
      %14 = sbr.rel target = $region3
    $region8: #{tpu_custom_call.1} parent=1 // loop_exit
      _
    %1164 = vsyncpa [#allocation3], 1
    %s1165 = scalar_lea.sflag [#allocation3], 1
    %1166 = vsyncpa %s1165, 1

</llo_original>
